<compile_context>
chip_gen: v5e
topology: v5e:2x2
jax: 0.10.0
libtpu: 0.0.40
codegen_flags: <defaults>
</compile_context>

<pallas_src>
import functools

import numpy as np
import jax
import jax.numpy as jnp
from jax.experimental import pallas as pl
from jax.experimental.pallas import tpu as pltpu

OUT_H = 7
OUT_W = 7
NUM_FEATURES = OUT_H * OUT_W        # 49
F_PAD = 128                         # lane-dense padded feature dim
LANE = 128
SUBLANE = 8


def _round_up(x, m):
    return ((x + m - 1) // m) * m


@functools.lru_cache(maxsize=None)
def _adaptive_avg_pool_matrix_np(H, W, out_h=OUT_H, out_w=OUT_W):
    """Exact nn.AdaptiveAvgPool2d((out_h, out_w)) as a (H*W, out_h*out_w) matrix."""
    P = np.zeros((H * W, out_h * out_w), dtype=np.float32)
    for oi in range(out_h):
        hs = (oi * H) // out_h
        he = -((-(oi + 1) * H) // out_h)        # ceil((oi+1)*H/out_h)
        for oj in range(out_w):
            ws = (oj * W) // out_w
            we = -((-(oj + 1) * W) // out_w)
            cnt = float((he - hs) * (we - ws))
            for ih in range(hs, he):
                for iw in range(ws, we):
                    P[ih * W + iw, oi * out_w + oj] = 1.0 / cnt
    return P


def _region_classifier_kernel(mask_ref, conv_ref, pool_ref, w_ref, b_ref,
                              fc_ref, out_ref):
    # Adaptive average pool as matmul: (TN, H*W) @ (H*W, F_PAD) -> (TN, F_PAD).
    # TODO(synk): for very large masks (e.g. 224x224) the dense pool matrix is
    # ~98% zeros and VMEM-heavy; an in-kernel 7x7 window mean would be better
    # there, but the matrix form is the only one that lowers cleanly for
    # arbitrary (H, W), so it is kept as the general path.
    pooled = jnp.dot(mask_ref[...], pool_ref[...],
                     preferred_element_type=jnp.float32)
    # Threshold (>= 0.5) -> binary float mask (padded columns stay 0).
    bin_mask = (pooled >= jnp.float32(0.5)).astype(jnp.float32)
    # Masked conv features == fc_fea (conv already flattened + zero padded).
    fc = conv_ref[...] * bin_mask
    fc_ref[...] = fc
    # Linear(49, num_classes) + Sigmoid, in the padded space.
    logits = jnp.dot(fc, w_ref[...],
                     preferred_element_type=jnp.float32) + b_ref[...]
    out_ref[...] = 1.0 / (1.0 + jnp.exp(-logits))


def _choose_tile_n(N, HW, c_pad):
    """Largest batch tile whose streamed (double-buffered) blocks fit a
    conservative VMEM budget that is safe on v5e / v6e / v7x."""
    stream_budget = 24 * 1024 * 1024
    hw_lanes = _round_up(HW, LANE)
    # 2x mask + 2x conv + 2x fc + 2x out buffers, f32.
    per_row = 4 * (2 * hw_lanes + 2 * F_PAD + 2 * F_PAD + 2 * c_pad)
    t = stream_budget // per_row
    t = max(SUBLANE, min(256, (t // SUBLANE) * SUBLANE))
    if N < t:
        t = max(SUBLANE, _round_up(N, SUBLANE))
    return int(t)


def _region_classifier_impl(conv_fea, mask, weight, bias):
    N = conv_fea.shape[0]
    H, W = mask.shape[2], mask.shape[3]
    HW = H * W
    num_classes = weight.shape[0]
    c_pad = _round_up(max(num_classes, LANE), LANE)

    # Flatten + pad to the lane-dense feature space.
    conv_flat = conv_fea.reshape(N, NUM_FEATURES).astype(jnp.float32)
    conv_pad = jnp.pad(conv_flat, ((0, 0), (0, F_PAD - NUM_FEATURES)))
    mask_flat = mask.reshape(N, HW).astype(jnp.float32)

    pool_np = _adaptive_avg_pool_matrix_np(H, W)
    pool_pad = jnp.asarray(
        np.pad(pool_np, ((0, 0), (0, F_PAD - NUM_FEATURES))))    # (HW, F_PAD)

    w = jnp.asarray(weight, jnp.float32)                          # (C, 49)
    w_pad = jnp.zeros((F_PAD, c_pad), jnp.float32)
    w_pad = w_pad.at[:NUM_FEATURES, :num_classes].set(w.T)
    b_pad = jnp.zeros((1, c_pad), jnp.float32)
    b_pad = b_pad.at[0, :num_classes].set(jnp.asarray(bias, jnp.float32))

    tile_n = _choose_tile_n(N, HW, c_pad)
    n_pad = _round_up(max(N, tile_n), tile_n)
    if n_pad != N:
        conv_pad = jnp.pad(conv_pad, ((0, n_pad - N), (0, 0)))
        mask_flat = jnp.pad(mask_flat, ((0, n_pad - N), (0, 0)))

    grid = (n_pad // tile_n,)

    # VMEM accounting: resident constants + double-buffered streamed blocks.
    hw_lanes = _round_up(HW, LANE)
    const_bytes = 4 * (_round_up(HW, SUBLANE) * F_PAD
                       + F_PAD * c_pad + SUBLANE * c_pad)
    stream_bytes = 4 * tile_n * (2 * hw_lanes + 4 * F_PAD + 2 * c_pad)
    vmem_limit = int(min(const_bytes + stream_bytes + (8 << 20), 64 << 20))

    cost = pl.CostEstimate(
        flops=int(2 * n_pad * HW * F_PAD + 2 * n_pad * F_PAD * c_pad),
        transcendentals=int(n_pad * c_pad),
        bytes_accessed=int(4 * (n_pad * HW + 2 * n_pad * F_PAD + HW * F_PAD
                                + F_PAD * c_pad + c_pad + n_pad * c_pad)),
    )

    grid_spec = pltpu.PrefetchScalarGridSpec(
        num_scalar_prefetch=0,
        grid=grid,
        in_specs=[
            pl.BlockSpec((tile_n, HW), lambda i: (i, 0)),      # mask stream
            pl.BlockSpec((tile_n, F_PAD), lambda i: (i, 0)),   # conv stream
            pl.BlockSpec((HW, F_PAD), lambda i: (0, 0)),       # pool (resident)
            pl.BlockSpec((F_PAD, c_pad), lambda i: (0, 0)),    # weight (resident)
            pl.BlockSpec((1, c_pad), lambda i: (0, 0)),        # bias (resident)
        ],
        out_specs=(
            pl.BlockSpec((tile_n, F_PAD), lambda i: (i, 0)),   # fc_fea (padded)
            pl.BlockSpec((tile_n, c_pad), lambda i: (i, 0)),   # out (padded)
        ),
    )

    fc_pad, out_pad = pl.pallas_call(
        _region_classifier_kernel,
        out_shape=(
            jax.ShapeDtypeStruct((n_pad, F_PAD), jnp.float32),
            jax.ShapeDtypeStruct((n_pad, c_pad), jnp.float32),
        ),
        grid_spec=grid_spec,
        compiler_params=pltpu.CompilerParams(
            dimension_semantics=("parallel",),
            vmem_limit_bytes=vmem_limit,
        ),
        cost_estimate=cost,
    )(mask_flat, conv_pad, pool_pad, w_pad, b_pad)

    return fc_pad[:N, :NUM_FEATURES], out_pad[:N, :num_classes]


region_classifier = jax.jit(_region_classifier_impl)


def region_classifier_ref(conv_fea, mask, weight, bias):
    """Pure-JAX reference of the PyTorch forward."""
    N = conv_fea.shape[0]
    H, W = mask.shape[2], mask.shape[3]
    P = jnp.asarray(_adaptive_avg_pool_matrix_np(H, W))
    pooled = mask.reshape(N, H * W).astype(jnp.float32) @ P
    bin_mask = (pooled >= 0.5).astype(jnp.float32)
    fc_fea = conv_fea.reshape(N, NUM_FEATURES) * bin_mask
    out = jax.nn.sigmoid(fc_fea @ weight.T + bias)
    return fc_fea, out


if __name__ == "__main__":
    key = jax.random.PRNGKey(0)
    k1, k2, k3, k4 = jax.random.split(key, 4)

    N, num_classes = 2, 8
    H = W = 14      # mask spatial size (adaptively pooled to 7x7)

    conv_fea = jax.random.normal(k1, (N, 1, OUT_H, OUT_W), dtype=jnp.float32)
    mask = jax.random.uniform(k2, (N, 1, H, W), dtype=jnp.float32)

    # Deterministic Linear(49, num_classes) params (uniform +-1/sqrt(49), like PyTorch init)
    bound = 1.0 / np.sqrt(float(NUM_FEATURES))
    weight = jax.random.uniform(k3, (num_classes, NUM_FEATURES), jnp.float32,
                                -bound, bound)
    bias = jax.random.uniform(k4, (num_classes,), jnp.float32, -bound, bound)

    fc_fea, out = region_classifier(conv_fea, mask, weight, bias)
    jax.block_until_ready((fc_fea, out))

    fc_ref, out_ref = region_classifier_ref(conv_fea, mask, weight, bias)
    assert fc_fea.shape == (N, NUM_FEATURES) and out.shape == (N, num_classes)
    assert np.allclose(np.asarray(fc_fea), np.asarray(fc_ref), atol=1e-5)
    assert np.allclose(np.asarray(out), np.asarray(out_ref), atol=1e-5)

    print("KERNEL_OK")
</pallas_src>

<mosaic_0001>
module attributes {stable_mosaic.version = 11 : i64} {
  func.func @_region_classifier_kernel(%arg0: i32, %arg1: memref<8x196xf32, #tpu.memory_space<vmem>>, %arg2: memref<8x128xf32, #tpu.memory_space<vmem>>, %arg3: memref<196x128xf32, #tpu.memory_space<vmem>>, %arg4: memref<128x128xf32, #tpu.memory_space<vmem>>, %arg5: memref<1x128xf32, #tpu.memory_space<vmem>>, %arg6: memref<8x128xf32, #tpu.memory_space<vmem>>, %arg7: memref<8x128xf32, #tpu.memory_space<vmem>>) attributes {dimension_semantics = [#tpu.dimension_semantics<parallel>], iteration_bounds = array<i64: 1>, scalar_prefetch = 0 : i64, scratch_operands = 0 : i64, tpu.core_type = #tpu.core_type<tc>, window_params = [{transform_indices = @transform_0, window_bounds = array<i64: 8, 196>}, {transform_indices = @transform_1, window_bounds = array<i64: 8, 128>}, {pipeline_mode = #tpu.pipeline_mode<synchronous>, transform_indices = @transform_2, window_bounds = array<i64: 196, 128>}, {pipeline_mode = #tpu.pipeline_mode<synchronous>, transform_indices = @transform_3, window_bounds = array<i64: 128, 128>}, {pipeline_mode = #tpu.pipeline_mode<synchronous>, transform_indices = @transform_4, window_bounds = array<i64: 1, 128>}, {transform_indices = @transform_5, window_bounds = array<i64: 8, 128>}, {transform_indices = @transform_6, window_bounds = array<i64: 8, 128>}]} {
    %c0 = arith.constant 0 : index
    %c0_0 = arith.constant 0 : index
    %0 = vector.load %arg1[%c0, %c0_0] : memref<8x196xf32, #tpu.memory_space<vmem>>, vector<8x196xf32>
    %c0_1 = arith.constant 0 : index
    %c0_2 = arith.constant 0 : index
    %1 = vector.load %arg3[%c0_1, %c0_2] : memref<196x128xf32, #tpu.memory_space<vmem>>, vector<196x128xf32>
    %cst = arith.constant dense<0.000000e+00> : vector<8x128xf32>
    %2 = tpu.matmul %0, %1, %cst {dimension_numbers = #tpu.dot_dimension_numbers<[1], [0], [0], [1], [0, 0, 1, 1], [], []>} : vector<8x196xf32>, vector<196x128xf32>, vector<8x128xf32> -> vector<8x128xf32>
    %cst_3 = arith.constant 5.000000e-01 : f32
    %3 = vector.broadcast %cst_3 : f32 to vector<8x128xf32>
    %4 = arith.cmpf oge, %2, %3 : vector<8x128xf32>
    %5 = arith.extui %4 : vector<8x128xi1> to vector<8x128xi32>
    %6 = arith.sitofp %5 : vector<8x128xi32> to vector<8x128xf32>
    %c0_4 = arith.constant 0 : index
    %c0_5 = arith.constant 0 : index
    %7 = vector.load %arg2[%c0_4, %c0_5] : memref<8x128xf32, #tpu.memory_space<vmem>>, vector<8x128xf32>
    %8 = arith.mulf %7, %6 : vector<8x128xf32>
    %c0_6 = arith.constant 0 : index
    %c0_7 = arith.constant 0 : index
    %9 = vector.load %arg6[%c0_6, %c0_7] : memref<8x128xf32, #tpu.memory_space<vmem>>, vector<8x128xf32>
    tpu.vector_store %arg6[%c0_6, %c0_7], %8 {strides = array<i32>} : memref<8x128xf32, #tpu.memory_space<vmem>>, vector<8x128xf32>,
    %c0_8 = arith.constant 0 : index
    %c0_9 = arith.constant 0 : index
    %10 = vector.load %arg4[%c0_8, %c0_9] : memref<128x128xf32, #tpu.memory_space<vmem>>, vector<128x128xf32>
    %cst_10 = arith.constant dense<0.000000e+00> : vector<8x128xf32>
    %11 = tpu.matmul %8, %10, %cst_10 {dimension_numbers = #tpu.dot_dimension_numbers<[1], [0], [0], [1], [0, 0, 1, 1], [], []>} : vector<8x128xf32>, vector<128x128xf32>, vector<8x128xf32> -> vector<8x128xf32>
    %c0_11 = arith.constant 0 : index
    %c0_12 = arith.constant 0 : index
    %12 = vector.load %arg5[%c0_11, %c0_12] : memref<1x128xf32, #tpu.memory_space<vmem>>, vector<1x128xf32>
    %13 = vector.broadcast %12 : vector<1x128xf32> to vector<8x128xf32>
    %14 = arith.addf %11, %13 : vector<8x128xf32>
    %cst_13 = arith.constant 0.000000e+00 : f32
    %15 = vector.broadcast %cst_13 : f32 to vector<8x128xf32>
    %16 = arith.subf %15, %14 : vector<8x128xf32>
    %17 = math.exp %16 : vector<8x128xf32>
    %cst_14 = arith.constant 1.000000e+00 : f32
    %18 = vector.broadcast %cst_14 : f32 to vector<8x128xf32>
    %19 = arith.addf %18, %17 : vector<8x128xf32>
    %cst_15 = arith.constant 1.000000e+00 : f32
    %20 = vector.broadcast %cst_15 : f32 to vector<8x128xf32>
    %21 = arith.divf %20, %19 : vector<8x128xf32>
    %c0_16 = arith.constant 0 : index
    %c0_17 = arith.constant 0 : index
    %22 = vector.load %arg7[%c0_16, %c0_17] : memref<8x128xf32, #tpu.memory_space<vmem>>, vector<8x128xf32>
    tpu.vector_store %arg7[%c0_16, %c0_17], %21 {strides = array<i32>} : memref<8x128xf32, #tpu.memory_space<vmem>>, vector<8x128xf32>,
    return
  }
  func.func @transform_0(%arg0: i32) -> (i32, i32) {
    %c0_i32 = arith.constant 0 : i32
    %c0_i32_0 = arith.constant 0 : i32
    return %arg0, %c0_i32 : i32, i32
  }
  func.func @transform_1(%arg0: i32) -> (i32, i32) {
    %c0_i32 = arith.constant 0 : i32
    %c0_i32_0 = arith.constant 0 : i32
    return %arg0, %c0_i32 : i32, i32
  }
  func.func @transform_2(%arg0: i32) -> (i32, i32) {
    %c0_i32 = arith.constant 0 : i32
    %c0_i32_0 = arith.constant 0 : i32
    %c0_i32_1 = arith.constant 0 : i32
    return %c0_i32, %c0_i32_0 : i32, i32
  }
  func.func @transform_3(%arg0: i32) -> (i32, i32) {
    %c0_i32 = arith.constant 0 : i32
    %c0_i32_0 = arith.constant 0 : i32
    %c0_i32_1 = arith.constant 0 : i32
    return %c0_i32, %c0_i32_0 : i32, i32
  }
  func.func @transform_4(%arg0: i32) -> (i32, i32) {
    %c0_i32 = arith.constant 0 : i32
    %c0_i32_0 = arith.constant 0 : i32
    %c0_i32_1 = arith.constant 0 : i32
    return %c0_i32, %c0_i32_0 : i32, i32
  }
  func.func @transform_5(%arg0: i32) -> (i32, i32) {
    %c0_i32 = arith.constant 0 : i32
    %c0_i32_0 = arith.constant 0 : i32
    return %arg0, %c0_i32 : i32, i32
  }
  func.func @transform_6(%arg0: i32) -> (i32, i32) {
    %c0_i32 = arith.constant 0 : i32
    %c0_i32_0 = arith.constant 0 : i32
    return %arg0, %c0_i32 : i32, i32
  }
}

</mosaic_0001>

<llo_original>
// kernel: _region_classifier_impl.1
$region0: #{_region_classifier_impl.1}
  #allocation0 [shape = 'u32[]', space=smem, size = 0x4, offset = 0x4, fixed_abs, tag = 'smem constant byte address 0x4 - core index']
  #allocation1 [shape = 'u32[72,128]{1,0:T(1,128)}', space=vmem, size = 0x9000, scoped, tag = 'internal scratch']
  %s0 = inlined_call_operand.vmem [shape: f32[8,196], index: 0, kind: input, shape index: {}]
  %s1 = inlined_call_operand.vmem [shape: f32[8,128], index: 1, kind: input, shape index: {}]
  %s2 = inlined_call_operand.vmem [shape: f32[196,128], index: 2, kind: input, shape index: {}]
  %s3 = inlined_call_operand.vmem [shape: f32[128,128], index: 3, kind: input, shape index: {}]
  %s4 = inlined_call_operand.vmem [shape: f32[1,128], index: 4, kind: input, shape index: {}]
  %s5 = inlined_call_operand.vmem [shape: f32[8,128], index: 5, kind: output, shape index: {0}]
  %s6 = inlined_call_operand.vmem [shape: f32[8,128], index: 6, kind: output, shape index: {1}]
  %7 = xla_tuple %s5, %s6
  %s8 = sld [smem:[#allocation0]]
  $region38: #{_region_classifier_impl.1} parent=0
    _
  %s10 = ssub.s32 1, %s8
  %s11 = scalar_select 0, %s10, %s8
  // Predicated region
  $region2: #{_region_classifier_impl.1} parent=0 // pred_check
    _
  $region3: #{_region_classifier_impl.1} parent=0 // pred_check_branch
    %13 = sbr.rel (0) target = $region5
  $region4: #{_region_classifier_impl.1} parent=0 // pred_region
    _
  $region5: #{_region_classifier_impl.1} parent=0 // pred_fallthru
    _
  // Predicated region
  $region6: #{_region_classifier_impl.1} parent=0 // pred_check
    _
  $region7: #{_region_classifier_impl.1} parent=0 // pred_check_branch
    %15 = sbr.rel (0) target = $region9
  $region8: #{_region_classifier_impl.1} parent=0 // pred_region
    _
  $region9: #{_region_classifier_impl.1} parent=0 // pred_fallthru
    _
  // Predicated region
  $region10: #{_region_classifier_impl.1} parent=0 // pred_check
    _
  $region11: #{_region_classifier_impl.1} parent=0 // pred_check_branch
    %17 = sbr.rel (0) target = $region13
  $region12: #{_region_classifier_impl.1} parent=0 // pred_region
    _
  $region13: #{_region_classifier_impl.1} parent=0 // pred_fallthru
    _
  // Predicated region
  $region14: #{_region_classifier_impl.1} parent=0 // pred_check
    _
  $region15: #{_region_classifier_impl.1} parent=0 // pred_check_branch
    %19 = sbr.rel (0) target = $region17
  $region16: #{_region_classifier_impl.1} parent=0 // pred_region
    _
  $region17: #{_region_classifier_impl.1} parent=0 // pred_fallthru
    _
  // Predicated region
  $region18: #{_region_classifier_impl.1} parent=0 // pred_check
    _
  $region19: #{_region_classifier_impl.1} parent=0 // pred_check_branch
    %21 = sbr.rel (0) target = $region21
  $region20: #{_region_classifier_impl.1} parent=0 // pred_region
    _
  $region21: #{_region_classifier_impl.1} parent=0 // pred_fallthru
    _
  %v22 = vld [vmem:[%s0] sm:$0xff]
  %v23 = vld [vmem:[%s0 + $0x8] sm:$0xff]
  %v24 = vld [vmem:[%s2] sm:$0xff]
  %v25 = vld [vmem:[%s2 + $0x8] sm:$0xff]
  %v26 = vld [vmem:[%s2 + $0x10] sm:$0xff]
  %v27 = vld [vmem:[%s2 + $0x18] sm:$0xff]
  %v28 = vld [vmem:[%s2 + $0x20] sm:$0xff]
  %v29 = vld [vmem:[%s2 + $0x28] sm:$0xff]
  %v30 = vld [vmem:[%s2 + $0x30] sm:$0xff]
  %v31 = vld [vmem:[%s2 + $0x38] sm:$0xff]
  %v32 = vld [vmem:[%s2 + $0x40] sm:$0xff]
  %v33 = vld [vmem:[%s2 + $0x48] sm:$0xff]
  %v34 = vld [vmem:[%s2 + $0x50] sm:$0xff]
  %v35 = vld [vmem:[%s2 + $0x58] sm:$0xff]
  %v36 = vld [vmem:[%s2 + $0x60] sm:$0xff]
  %v37 = vld [vmem:[%s2 + $0x68] sm:$0xff]
  %v38 = vld [vmem:[%s2 + $0x70] sm:$0xff]
  %v39 = vld [vmem:[%s2 + $0x78] sm:$0xff]
  %v40 = vld [vmem:[%s2 + $0x80] sm:$0xff]
  %v41 = vld [vmem:[%s2 + $0x88] sm:$0xff]
  %v42 = vld [vmem:[%s2 + $0x90] sm:$0xff]
  %v43 = vld [vmem:[%s2 + $0x98] sm:$0xff]
  %v44 = vld [vmem:[%s2 + $0xa0] sm:$0xff]
  %v45 = vld [vmem:[%s2 + $0xa8] sm:$0xff]
  %v46 = vld [vmem:[%s2 + $0xb0] sm:$0xff]
  %v47 = vld [vmem:[%s2 + $0xb8] sm:$0xff]
  %v48 = vld [vmem:[%s2 + $0xc0] sm:$0xf]
  %vm49 = vcmask 556032
  %v51 = vsel %vm49, %v23, 0
  %vm53 = vcmask 1043456
  %v55 = vsel %vm53, %v48, 0
  %57 = vmatpush.msra.mxu0 %v39
  %58 = vmatpush.msra.mxu0 %v38
  %59 = vmatpush.msra.mxu0 %v37
  %60 = vmatpush.msra.mxu0 %v36
  %61 = vmatpush.msra.mxu0 %v35
  %62 = vmatpush.msra.mxu0 %v34
  %63 = vmatpush.msra.mxu0 %v33
  %64 = vmatpush.msra.mxu0 %v32
  %65 = vmatpush.msra.mxu0 %v31
  %66 = vmatpush.msra.mxu0 %v30
  %67 = vmatpush.msra.mxu0 %v29
  %68 = vmatpush.msra.mxu0 %v28
  %69 = vmatpush.msra.mxu0 %v27
  %70 = vmatpush.msra.mxu0 %v26
  %71 = vmatpush.msra.mxu0 %v25
  %72 = vmatpush.msra.mxu0 %v24
  %73 = vmatmul.f32.gmra.mxu0 %v22
  %v74 = vpop.f32.mrf.mxu0
  %v75 = vadd.f32 0.0, %v74
  %76 = vdwg.mxu0
  %77 = vmatpush.msra.mxu0 0.0
  %78 = vmatpush.msra.mxu0 0.0
  %79 = vmatpush.msra.mxu0 0.0
  %80 = vmatpush.msra.mxu0 0.0
  %81 = vmatpush.msra.mxu0 0.0
  %82 = vmatpush.msra.mxu0 0.0
  %83 = vmatpush.msra.mxu0 0.0
  %84 = vmatpush.msra.mxu0 %v55
  %85 = vmatpush.msra.mxu0 %v47
  %86 = vmatpush.msra.mxu0 %v46
  %87 = vmatpush.msra.mxu0 %v45
  %88 = vmatpush.msra.mxu0 %v44
  %89 = vmatpush.msra.mxu0 %v43
  %90 = vmatpush.msra.mxu0 %v42
  %91 = vmatpush.msra.mxu0 %v41
  %92 = vmatpush.msra.mxu0 %v40
  %93 = vmatmul.f32.gmra.mxu0 %v51
  %v94 = vpop.f32.mrf.mxu0
  %v95 = vadd.f32 %v75, %v94
  %96 = vdwg.mxu0
  %vm97 = vcmp.ge.f32.partialorder %v95, 0.5
  %v98 = vsel %vm97, 1, 0
  %v99 = vcvt.s32.f32 %v98
  %v100 = vld [vmem:[%s1] sm:$0xff]
  %v101 = vmul.f32 %v100, %v99
  %102 = vst [vmem:[%s5] sm:$0xff] %v101
  %v103 = vld [vmem:[%s3] sm:$0xff]
  %v104 = vld [vmem:[%s3 + $0x8] sm:$0xff]
  %v105 = vld [vmem:[%s3 + $0x10] sm:$0xff]
  %v106 = vld [vmem:[%s3 + $0x18] sm:$0xff]
  %v107 = vld [vmem:[%s3 + $0x20] sm:$0xff]
  %v108 = vld [vmem:[%s3 + $0x28] sm:$0xff]
  %v109 = vld [vmem:[%s3 + $0x30] sm:$0xff]
  %v110 = vld [vmem:[%s3 + $0x38] sm:$0xff]
  %v111 = vld [vmem:[%s3 + $0x40] sm:$0xff]
  %v112 = vld [vmem:[%s3 + $0x48] sm:$0xff]
  %v113 = vld [vmem:[%s3 + $0x50] sm:$0xff]
  %v114 = vld [vmem:[%s3 + $0x58] sm:$0xff]
  %v115 = vld [vmem:[%s3 + $0x60] sm:$0xff]
  %v116 = vld [vmem:[%s3 + $0x68] sm:$0xff]
  %v117 = vld [vmem:[%s3 + $0x70] sm:$0xff]
  %v118 = vld [vmem:[%s3 + $0x78] sm:$0xff]
  %v119 = vld [vmem:[%s4] sm:$0x1]
  %v121 = vperm.slane %v119, 0
  %123 = vmatpush.msra.mxu0 %v118
  %124 = vmatpush.msra.mxu0 %v117
  %125 = vmatpush.msra.mxu0 %v116
  %126 = vmatpush.msra.mxu0 %v115
  %127 = vmatpush.msra.mxu0 %v114
  %128 = vmatpush.msra.mxu0 %v113
  %129 = vmatpush.msra.mxu0 %v112
  %130 = vmatpush.msra.mxu0 %v111
  %131 = vmatpush.msra.mxu0 %v110
  %132 = vmatpush.msra.mxu0 %v109
  %133 = vmatpush.msra.mxu0 %v108
  %134 = vmatpush.msra.mxu0 %v107
  %135 = vmatpush.msra.mxu0 %v106
  %136 = vmatpush.msra.mxu0 %v105
  %137 = vmatpush.msra.mxu0 %v104
  %138 = vmatpush.msra.mxu0 %v103
  %139 = vmatmul.f32.gmra.mxu0 %v101
  %v140 = vpop.f32.mrf.mxu0
  %v141 = vadd.f32 %v121, %v140
  %142 = vdwg.mxu0
  %v143 = vsub.f32 0.0, %v141
  %v144 = vmul.f32 %v143, 1.442695
  %v145 = vpow.pop %v144
  %v146 = vadd.f32 %v145, 1.0
  %v147 = vrcp.pop %v146
  %v148 = vmul.f32 %v146, %v147
  %v149 = vsub.f32 1.0, %v148
  %v150 = vmul.f32 %v147, %v149
  %v151 = vadd.f32 %v147, %v150
  %vm152 = vweird.f32 %v146
  %vm153 = vweird.f32 %v147
  %vm154 = vmor %vm152, %vm153
  %v155 = vsel %vm154, %v147, %v151
  %v156 = vand.u32 2147483647, %v146
  %vm157 = vcmp.eq.f32.partialorder %v156, 8.507059e+37
  %v158 = vand.u32 %v146, 2147483648
  %v159 = vor.u32 1.1754944e-38, %v158
  %v160 = vsel %vm157, %v159, %v155
  %v161 = vmul.f32 1.0, %v160
  %162 = vst [vmem:[%s6] sm:$0xff] %v161
  // Predicated region
  $region22: #{_region_classifier_impl.1} parent=0 // pred_check
    _
  $region23: #{_region_classifier_impl.1} parent=0 // pred_check_branch
    %164 = sbr.rel (0) target = $region25
  $region24: #{_region_classifier_impl.1} parent=0 // pred_region
    _
  $region25: #{_region_classifier_impl.1} parent=0 // pred_fallthru
    _
  // Predicated region
  $region26: #{_region_classifier_impl.1} parent=0 // pred_check
    _
  $region27: #{_region_classifier_impl.1} parent=0 // pred_check_branch
    %166 = sbr.rel (0) target = $region29
  $region28: #{_region_classifier_impl.1} parent=0 // pred_region
    _
  $region29: #{_region_classifier_impl.1} parent=0 // pred_fallthru
    _
  // Predicated region
  $region30: #{_region_classifier_impl.1} parent=0 // pred_check
    _
  $region31: #{_region_classifier_impl.1} parent=0 // pred_check_branch
    %168 = sbr.rel (0) target = $region33
  $region32: #{_region_classifier_impl.1} parent=0 // pred_region
    _
  $region33: #{_region_classifier_impl.1} parent=0 // pred_fallthru
    _
  // Predicated region
  $region34: #{_region_classifier_impl.1} parent=0 // pred_check
    _
  $region35: #{_region_classifier_impl.1} parent=0 // pred_check_branch
    %170 = sbr.rel (0) target = $region37
  $region36: #{_region_classifier_impl.1} parent=0 // pred_region
    _
  $region37: #{_region_classifier_impl.1} parent=0 // pred_fallthru
    _

</llo_original>
